<compile_context>
chip_gen: v7x
topology: tpu7x:2x2x1
jax: 0.10.0
libtpu: 0.0.40
codegen_flags: <defaults>
</compile_context>

<pallas_src>
import functools

import jax
import jax.numpy as jnp
import numpy as np
from jax.experimental import pallas as pl
from jax.experimental.pallas import tpu as pltpu

B_HIDDEN = 128                 # stand-in for b_hidden (768/1024), kept small
MLP_H = 300                    # classification hidden width, as in the module
MLP_PAD = 384                  # 300 padded up to a lane-dense multiple of 128
D_OUT = 1
TILE_ROWS = 2048               # pooling tile (amortizes ~0.35 us/step overhead)
VMEM_BUDGET = 40 * 1024 * 1024  # streaming-buffer budget, safe on v5e/v6e/v7x
PSUM_ROWS = 8                  # partial-sum rows padded to a full sublane tile


def _round_up(n, m):
    return ((n + m - 1) // m) * m


# ----------------------------------------------------------------------------
# Kernel 1: HBM-streaming pooling (the hot path).
# ----------------------------------------------------------------------------
def pool_kernel(h1_ref, h2_ref, psum1_ref, psum2_ref, acc1_ref, acc2_ref,
                *, n_rows, tile_rows, tiles_per_split, needs_mask, hidden):
    c = pl.program_id(0)            # core-split index ("parallel")
    j = pl.program_id(1)            # tile index within the split ("arbitrary")

    @pl.when(j == 0)
    def _init():
        acc1_ref[...] = jnp.zeros_like(acc1_ref)
        acc2_ref[...] = jnp.zeros_like(acc2_ref)

    row_start = (c * tiles_per_split + j) * tile_rows

    def _mxu_accumulate():
        # (1,K)x(K,H) ones mat-vec: upcast + row reduction run on the MXU
        # (hidden under the DMA), keeping the streaming loop off the VALU.
        ones = jnp.ones((1, tile_rows), h1_ref.dtype)
        acc1_ref[...] += jnp.dot(ones, h1_ref[...],
                                 preferred_element_type=jnp.float32)
        acc2_ref[...] += jnp.dot(ones, h2_ref[...],
                                 preferred_element_type=jnp.float32)

    if needs_mask:
        @pl.when(row_start + tile_rows <= n_rows)
        def _fast():
            _mxu_accumulate()

        @pl.when(row_start + tile_rows > n_rows)
        def _tail():
            # Tail / over-coverage tiles only: select-based masking is
            # NaN-safe against garbage in the out-of-bounds block region.
            row_ids = jax.lax.broadcasted_iota(jnp.int32, (tile_rows, 1), 0)
            valid = (row_ids + row_start) < n_rows
            h1 = jnp.where(valid, h1_ref[...].astype(jnp.float32), 0.0)
            h2 = jnp.where(valid, h2_ref[...].astype(jnp.float32), 0.0)
            acc1_ref[...] += jnp.sum(h1, axis=0, keepdims=True)
            acc2_ref[...] += jnp.sum(h2, axis=0, keepdims=True)
    else:
        _mxu_accumulate()

    @pl.when(j == pl.num_programs(1) - 1)
    def _emit():
        # Broadcast the (1,H) core-local sum over the 8-row output tile so the
        # out block stays (8,128)-tiled; the finalize divides by 8*n_rows.
        zeros = jnp.zeros((PSUM_ROWS, hidden), jnp.float32)
        psum1_ref[...] = zeros + acc1_ref[...]
        psum2_ref[...] = zeros + acc2_ref[...]


# ----------------------------------------------------------------------------
# Kernel 2: one-shot combine + abs-diff + 5-layer MLP (negligible wall-clock).
# ----------------------------------------------------------------------------
def mlp_kernel(ps1_ref, ps2_ref,
               w1a_ref, w1b_ref, w1c_ref, b1_ref,
               w2_ref, b2_ref, w3_ref, b3_ref, w4_ref, b4_ref,
               w5_ref, b5_ref, out_ref, *, n_rows):
    inv = jnp.float32(1.0 / (PSUM_ROWS * n_rows))   # psum rows are 8x-broadcast
    rep1 = jnp.sum(ps1_ref[...], axis=0, keepdims=True) * inv   # (1, H)
    rep2 = jnp.sum(ps2_ref[...], axis=0, keepdims=True) * inv
    rep3 = jnp.abs(rep1 - rep2)

    # cat([rep1, rep2, rep3]) @ w1  ==  rep1@w1a + rep2@w1b + rep3@w1c
    x = jnp.tanh(
        jnp.dot(rep1, w1a_ref[...], preferred_element_type=jnp.float32)
        + jnp.dot(rep2, w1b_ref[...], preferred_element_type=jnp.float32)
        + jnp.dot(rep3, w1c_ref[...], preferred_element_type=jnp.float32)
        + b1_ref[...])
    x = jnp.tanh(jnp.dot(x, w2_ref[...],
                         preferred_element_type=jnp.float32) + b2_ref[...])
    x = jnp.tanh(jnp.dot(x, w3_ref[...],
                         preferred_element_type=jnp.float32) + b3_ref[...])
    x = jnp.tanh(jnp.dot(x, w4_ref[...],
                         preferred_element_type=jnp.float32) + b4_ref[...])
    out_ref[...] = jnp.dot(x, w5_ref[...],
                           preferred_element_type=jnp.float32) + b5_ref[...]


def _pad_params(params, hidden):
    """Zero-pad the 300-wide MLP to MLP_PAD lanes (bit-identical results)."""
    w1, b1, w2, b2, w3, b3, w4, b4, w5, b5 = params
    pc = MLP_PAD - MLP_H
    w1p = jnp.pad(w1, ((0, 0), (0, pc)))                 # (3H, 384)
    w1a, w1b, w1c = (w1p[:hidden], w1p[hidden:2 * hidden], w1p[2 * hidden:])
    pad_sq = lambda w: jnp.pad(w, ((0, pc), (0, pc)))    # (384, 384)
    pad_b = lambda b: jnp.pad(b, ((0, 0), (0, pc)))      # (1, 384)
    w5p = jnp.pad(w5, ((0, pc), (0, 0)))                 # (384, 1)
    return (w1a, w1b, w1c, pad_b(b1),
            pad_sq(w2), pad_b(b2), pad_sq(w3), pad_b(b3),
            pad_sq(w4), pad_b(b4), w5p, b5)


def complexity_ranker(hidden1, hidden2, params, *, tile_rows=TILE_ROWS):
    """hidden1/hidden2: (B, S, H) BERT last hidden states (bf16 preferred)."""
    B, S, H = hidden1.shape
    n_rows = B * S
    h1 = hidden1.reshape(n_rows, H)
    h2 = hidden2.reshape(n_rows, H)
    itemsize = jnp.dtype(hidden1.dtype).itemsize

    # ---------------- tile / grid selection ---------------------------------
    row_align = 16 if itemsize < 4 else 8     # bf16 packs 16 sublanes per vreg
    tile_rows = max(row_align, min(tile_rows, _round_up(n_rows, row_align)))
    # Keep 2 streams x 2 pipeline buffers of hidden tiles under the budget.
    while tile_rows > row_align and 4 * tile_rows * H * itemsize > VMEM_BUDGET:
        tile_rows //= 2
    tile_rows = _round_up(tile_rows, row_align)

    n_tiles = pl.cdiv(n_rows, tile_rows)
    n_splits = 2 if n_tiles >= 2 else 1       # v7x: shard rows across both TCs
    tiles_per_split = pl.cdiv(n_tiles, n_splits)
    needs_mask = (n_splits * tiles_per_split * tile_rows) != n_rows

    def h_index(c, j):
        # Over-coverage tiles (odd n_tiles with 2 splits) are clamped onto
        # real data and fully masked out in-kernel.
        return (jnp.minimum(c * tiles_per_split + j, n_tiles - 1), 0)

    stream_bytes = 4 * tile_rows * H * itemsize       # 2 streams x 2 buffers
    vmem_limit = int(min(48 * 1024 * 1024,
                         max(16 * 1024 * 1024, stream_bytes + 4 * 1024 * 1024)))

    pool_cost = pl.CostEstimate(
        flops=2 * 2 * n_rows * H,             # one MAC / element / stream
        transcendentals=0,
        bytes_accessed=2 * n_rows * H * itemsize
        + 2 * n_splits * PSUM_ROWS * H * 4)

    psum_shape = (n_splits * PSUM_ROWS, H)
    psum1, psum2 = pl.pallas_call(
        functools.partial(pool_kernel, n_rows=n_rows, tile_rows=tile_rows,
                          tiles_per_split=tiles_per_split,
                          needs_mask=needs_mask, hidden=H),
        out_shape=(jax.ShapeDtypeStruct(psum_shape, jnp.float32),
                   jax.ShapeDtypeStruct(psum_shape, jnp.float32)),
        grid_spec=pltpu.PrefetchScalarGridSpec(
            num_scalar_prefetch=0,
            grid=(n_splits, tiles_per_split),
            in_specs=[pl.BlockSpec((tile_rows, H), h_index),
                      pl.BlockSpec((tile_rows, H), h_index)],
            out_specs=[pl.BlockSpec((PSUM_ROWS, H), lambda c, j: (c, 0)),
                       pl.BlockSpec((PSUM_ROWS, H), lambda c, j: (c, 0))],
            scratch_shapes=[pltpu.VMEM((1, H), jnp.float32),
                            pltpu.VMEM((1, H), jnp.float32)]),
        compiler_params=pltpu.CompilerParams(
            dimension_semantics=("parallel", "arbitrary"),
            vmem_limit_bytes=vmem_limit),
        cost_estimate=pool_cost,
    )(h1, h2)

    # ---------------- tiny one-shot MLP call --------------------------------
    padded = _pad_params(params, H)
    (w1a, w1b, w1c, b1, w2, b2, w3, b3, w4, b4, w5, b5) = padded
    weight_bytes = sum(int(np.prod(p.shape)) * 4 for p in padded)

    mlp_cost = pl.CostEstimate(
        flops=2 * (3 * H * MLP_PAD + 3 * MLP_PAD * MLP_PAD + MLP_PAD * D_OUT),
        transcendentals=4 * MLP_PAD,
        bytes_accessed=weight_bytes + 2 * n_splits * PSUM_ROWS * H * 4 + 4)

    const = lambda shape: pl.BlockSpec(shape, lambda i: (0, 0))
    out = pl.pallas_call(
        functools.partial(mlp_kernel, n_rows=n_rows),
        out_shape=jax.ShapeDtypeStruct((1, D_OUT), jnp.float32),
        grid_spec=pltpu.PrefetchScalarGridSpec(
            num_scalar_prefetch=0,
            grid=(1,),
            in_specs=[const(psum_shape), const(psum_shape),
                      const((H, MLP_PAD)), const((H, MLP_PAD)),
                      const((H, MLP_PAD)), const((1, MLP_PAD)),
                      const((MLP_PAD, MLP_PAD)), const((1, MLP_PAD)),
                      const((MLP_PAD, MLP_PAD)), const((1, MLP_PAD)),
                      const((MLP_PAD, MLP_PAD)), const((1, MLP_PAD)),
                      const((MLP_PAD, D_OUT)), const((1, D_OUT))],
            out_specs=pl.BlockSpec((1, D_OUT), lambda i: (0, 0))),
        compiler_params=pltpu.CompilerParams(
            dimension_semantics=("arbitrary",),
            vmem_limit_bytes=int(min(48 * 1024 * 1024,
                                     2 * weight_bytes + 8 * 1024 * 1024))),
        cost_estimate=mlp_cost,
    )(psum1, psum2, w1a, w1b, w1c, b1, w2, b2, w3, b3, w4, b4, w5, b5)

    # torch.nn.Linear applied to a 1-D input returns shape (1,)
    return out.reshape((D_OUT,))


# ----------------------------------------------------------------------------
# Deterministic test harness.
# ----------------------------------------------------------------------------
def _init_linear(key, fan_in, fan_out):
    """Deterministic torch-style uniform(-1/sqrt(fan_in), 1/sqrt(fan_in))."""
    kw, kb = jax.random.split(key)
    bound = 1.0 / np.sqrt(fan_in)
    w = jax.random.uniform(kw, (fan_in, fan_out), jnp.float32, -bound, bound)
    b = jax.random.uniform(kb, (1, fan_out), jnp.float32, -bound, bound)
    return w, b


def _reference(hidden1, hidden2, params):
    w1, b1, w2, b2, w3, b3, w4, b4, w5, b5 = params
    rep1 = jnp.mean(jnp.mean(hidden1, axis=1), axis=0)
    rep2 = jnp.mean(jnp.mean(hidden2, axis=1), axis=0)
    rep3 = jnp.abs(rep1 - rep2)
    x = jnp.concatenate([rep1, rep2, rep3])[None, :]
    x = jnp.tanh(x @ w1 + b1)
    x = jnp.tanh(x @ w2 + b2)
    x = jnp.tanh(x @ w3 + b3)
    x = jnp.tanh(x @ w4 + b4)
    return (x @ w5 + b5).reshape((D_OUT,))


if __name__ == "__main__":
    key = jax.random.PRNGKey(0)
    k_h1, k_h2, k1, k2, k3, k4, k5 = jax.random.split(key, 7)

    H = B_HIDDEN
    w1, b1 = _init_linear(k1, 3 * H, MLP_H)
    w2, b2 = _init_linear(k2, MLP_H, MLP_H)
    w3, b3 = _init_linear(k3, MLP_H, MLP_H)
    w4, b4 = _init_linear(k4, MLP_H, MLP_H)
    w5, b5 = _init_linear(k5, MLP_H, D_OUT)
    params = (w1, b1, w2, b2, w3, b3, w4, b4, w5, b5)

    # 1) Small default shape (B=2, S=8, H=128), f32: exact vs. reference.
    hidden1 = jax.random.normal(k_h1, (2, 8, H), jnp.float32)   # bert(token1)
    hidden2 = jax.random.normal(k_h2, (2, 8, H), jnp.float32)   # bert(token2)
    pred = jax.block_until_ready(complexity_ranker(hidden1, hidden2, params))
    ref = jax.block_until_ready(_reference(hidden1, hidden2, params))
    assert pred.shape == (D_OUT,)
    np.testing.assert_allclose(np.asarray(pred), np.asarray(ref),
                               rtol=1e-5, atol=1e-5)

    # 2) Multi-tile path exercising the 2-way core split (4 tiles of 128 rows).
    h1b = jax.random.normal(k_h1, (4, 128, H), jnp.float32)
    h2b = jax.random.normal(k_h2, (4, 128, H), jnp.float32)
    pred_b = jax.block_until_ready(
        complexity_ranker(h1b, h2b, params, tile_rows=128))
    ref_b = jax.block_until_ready(_reference(h1b, h2b, params))
    np.testing.assert_allclose(np.asarray(pred_b), np.asarray(ref_b),
                               rtol=1e-5, atol=1e-5)

    # 3) Ragged rows (odd tile count -> over-coverage tile + partial tail mask).
    h1c = jax.random.normal(k_h1, (3, 100, H), jnp.float32)
    h2c = jax.random.normal(k_h2, (3, 100, H), jnp.float32)
    pred_c = jax.block_until_ready(
        complexity_ranker(h1c, h2c, params, tile_rows=128))
    ref_c = jax.block_until_ready(_reference(h1c, h2c, params))
    np.testing.assert_allclose(np.asarray(pred_c), np.asarray(ref_c),
                               rtol=1e-5, atol=1e-5)

    # 4) bf16 hidden-state streaming (preferred dtype: halves HBM read bytes).
    pred_bf16 = jax.block_until_ready(
        complexity_ranker(hidden1.astype(jnp.bfloat16),
                          hidden2.astype(jnp.bfloat16), params))
    assert pred_bf16.shape == (D_OUT,)
    assert np.all(np.isfinite(np.asarray(pred_bf16)))

    print("KERNEL_OK")
</pallas_src>

<mosaic_0001>
module attributes {stable_mosaic.version = 11 : i64} {
  func.func @pool_kernel(%arg0: i32, %arg1: i32, %arg2: memref<16x128xf32, #tpu.memory_space<vmem>>, %arg3: memref<16x128xf32, #tpu.memory_space<vmem>>, %arg4: memref<8x128xf32, #tpu.memory_space<vmem>>, %arg5: memref<8x128xf32, #tpu.memory_space<vmem>>, %arg6: memref<1x128xf32, #tpu.memory_space<vmem>>, %arg7: memref<1x128xf32, #tpu.memory_space<vmem>>) attributes {dimension_semantics = [#tpu.dimension_semantics<parallel>, #tpu.dimension_semantics<arbitrary>], iteration_bounds = array<i64: 1, 1>, scalar_prefetch = 0 : i64, scratch_operands = 2 : i64, tpu.core_type = #tpu.core_type<tc>, window_params = [{transform_indices = @transform_0, window_bounds = array<i64: 16, 128>}, {transform_indices = @transform_1, window_bounds = array<i64: 16, 128>}, {transform_indices = @transform_2, window_bounds = array<i64: 8, 128>}, {transform_indices = @transform_3, window_bounds = array<i64: 8, 128>}]} {
    %c0_i32 = arith.constant 0 : i32
    %0 = arith.cmpi eq, %arg1, %c0_i32 : i32
    %1 = arith.extui %0 : i1 to i32
    %c0_i32_0 = arith.constant 0 : i32
    %2 = arith.cmpi ne, %1, %c0_i32_0 : i32
    scf.if %2 {
      %cst_16 = arith.constant 0.000000e+00 : f32
      %17 = vector.broadcast %cst_16 : f32 to vector<1x128xf32>
      %c0_17 = arith.constant 0 : index
      %c0_18 = arith.constant 0 : index
      %18 = vector.load %arg6[%c0_17, %c0_18] : memref<1x128xf32, #tpu.memory_space<vmem>>, vector<1x128xf32>
      tpu.vector_store %arg6[%c0_17, %c0_18], %17 {strides = array<i32>} : memref<1x128xf32, #tpu.memory_space<vmem>>, vector<1x128xf32>,
      %cst_19 = arith.constant 0.000000e+00 : f32
      %19 = vector.broadcast %cst_19 : f32 to vector<1x128xf32>
      %c0_20 = arith.constant 0 : index
      %c0_21 = arith.constant 0 : index
      %20 = vector.load %arg7[%c0_20, %c0_21] : memref<1x128xf32, #tpu.memory_space<vmem>>, vector<1x128xf32>
      tpu.vector_store %arg7[%c0_20, %c0_21], %19 {strides = array<i32>} : memref<1x128xf32, #tpu.memory_space<vmem>>, vector<1x128xf32>,
    } else {
    }
    %cst = arith.constant 1.000000e+00 : f32
    %3 = vector.broadcast %cst : f32 to vector<1x16xf32>
    %c0 = arith.constant 0 : index
    %c0_1 = arith.constant 0 : index
    %4 = vector.load %arg6[%c0, %c0_1] : memref<1x128xf32, #tpu.memory_space<vmem>>, vector<1x128xf32>
    %c0_2 = arith.constant 0 : index
    %c0_3 = arith.constant 0 : index
    %5 = vector.load %arg2[%c0_2, %c0_3] : memref<16x128xf32, #tpu.memory_space<vmem>>, vector<16x128xf32>
    %cst_4 = arith.constant dense<0.000000e+00> : vector<1x128xf32>
    %6 = tpu.matmul %3, %5, %cst_4 {dimension_numbers = #tpu.dot_dimension_numbers<[1], [0], [0], [1], [0, 0, 1, 1], [], []>} : vector<1x16xf32>, vector<16x128xf32>, vector<1x128xf32> -> vector<1x128xf32>
    %7 = arith.addf %4, %6 : vector<1x128xf32>
    %c0_5 = arith.constant 0 : index
    %c0_6 = arith.constant 0 : index
    %8 = vector.load %arg6[%c0_5, %c0_6] : memref<1x128xf32, #tpu.memory_space<vmem>>, vector<1x128xf32>
    tpu.vector_store %arg6[%c0_5, %c0_6], %7 {strides = array<i32>} : memref<1x128xf32, #tpu.memory_space<vmem>>, vector<1x128xf32>,
    %c0_7 = arith.constant 0 : index
    %c0_8 = arith.constant 0 : index
    %9 = vector.load %arg7[%c0_7, %c0_8] : memref<1x128xf32, #tpu.memory_space<vmem>>, vector<1x128xf32>
    %c0_9 = arith.constant 0 : index
    %c0_10 = arith.constant 0 : index
    %10 = vector.load %arg3[%c0_9, %c0_10] : memref<16x128xf32, #tpu.memory_space<vmem>>, vector<16x128xf32>
    %cst_11 = arith.constant dense<0.000000e+00> : vector<1x128xf32>
    %11 = tpu.matmul %3, %10, %cst_11 {dimension_numbers = #tpu.dot_dimension_numbers<[1], [0], [0], [1], [0, 0, 1, 1], [], []>} : vector<1x16xf32>, vector<16x128xf32>, vector<1x128xf32> -> vector<1x128xf32>
    %12 = arith.addf %9, %11 : vector<1x128xf32>
    %c0_12 = arith.constant 0 : index
    %c0_13 = arith.constant 0 : index
    %13 = vector.load %arg7[%c0_12, %c0_13] : memref<1x128xf32, #tpu.memory_space<vmem>>, vector<1x128xf32>
    tpu.vector_store %arg7[%c0_12, %c0_13], %12 {strides = array<i32>} : memref<1x128xf32, #tpu.memory_space<vmem>>, vector<1x128xf32>,
    %c0_i32_14 = arith.constant 0 : i32
    %14 = arith.cmpi eq, %arg1, %c0_i32_14 : i32
    %15 = arith.extui %14 : i1 to i32
    %c0_i32_15 = arith.constant 0 : i32
    %16 = arith.cmpi ne, %15, %c0_i32_15 : i32
    scf.if %16 {
      %cst_16 = arith.constant 0.000000e+00 : f32
      %17 = vector.broadcast %cst_16 : f32 to vector<8x128xf32>
      %c0_17 = arith.constant 0 : index
      %c0_18 = arith.constant 0 : index
      %18 = vector.load %arg6[%c0_17, %c0_18] : memref<1x128xf32, #tpu.memory_space<vmem>>, vector<1x128xf32>
      %19 = vector.broadcast %18 : vector<1x128xf32> to vector<8x128xf32>
      %20 = arith.addf %17, %19 : vector<8x128xf32>
      %c0_19 = arith.constant 0 : index
      %c0_20 = arith.constant 0 : index
      %21 = vector.load %arg4[%c0_19, %c0_20] : memref<8x128xf32, #tpu.memory_space<vmem>>, vector<8x128xf32>
      tpu.vector_store %arg4[%c0_19, %c0_20], %20 {strides = array<i32>} : memref<8x128xf32, #tpu.memory_space<vmem>>, vector<8x128xf32>,
      %c0_21 = arith.constant 0 : index
      %c0_22 = arith.constant 0 : index
      %22 = vector.load %arg7[%c0_21, %c0_22] : memref<1x128xf32, #tpu.memory_space<vmem>>, vector<1x128xf32>
      %23 = vector.broadcast %22 : vector<1x128xf32> to vector<8x128xf32>
      %24 = arith.addf %17, %23 : vector<8x128xf32>
      %c0_23 = arith.constant 0 : index
      %c0_24 = arith.constant 0 : index
      %25 = vector.load %arg5[%c0_23, %c0_24] : memref<8x128xf32, #tpu.memory_space<vmem>>, vector<8x128xf32>
      tpu.vector_store %arg5[%c0_23, %c0_24], %24 {strides = array<i32>} : memref<8x128xf32, #tpu.memory_space<vmem>>, vector<8x128xf32>,
    } else {
    }
    return
  }
  func.func @transform_0(%arg0: i32, %arg1: i32) -> (i32, i32) {
    %c1_i32 = arith.constant 1 : i32
    %0 = arith.muli %arg0, %c1_i32 : i32
    %1 = arith.addi %0, %arg1 : i32
    %c0_i32 = arith.constant 0 : i32
    %2 = arith.minsi %1, %c0_i32 : i32
    %c0_i32_0 = arith.constant 0 : i32
    %c0_i32_1 = arith.constant 0 : i32
    return %2, %c0_i32_0 : i32, i32
  }
  func.func @transform_1(%arg0: i32, %arg1: i32) -> (i32, i32) {
    %c1_i32 = arith.constant 1 : i32
    %0 = arith.muli %arg0, %c1_i32 : i32
    %1 = arith.addi %0, %arg1 : i32
    %c0_i32 = arith.constant 0 : i32
    %2 = arith.minsi %1, %c0_i32 : i32
    %c0_i32_0 = arith.constant 0 : i32
    %c0_i32_1 = arith.constant 0 : i32
    return %2, %c0_i32_0 : i32, i32
  }
  func.func @transform_2(%arg0: i32, %arg1: i32) -> (i32, i32) {
    %c0_i32 = arith.constant 0 : i32
    %c0_i32_0 = arith.constant 0 : i32
    return %arg0, %c0_i32 : i32, i32
  }
  func.func @transform_3(%arg0: i32, %arg1: i32) -> (i32, i32) {
    %c0_i32 = arith.constant 0 : i32
    %c0_i32_0 = arith.constant 0 : i32
    return %arg0, %c0_i32 : i32, i32
  }
}

</mosaic_0001>

<llo_original>
// kernel: tpu_custom_call.1
$region0: #{tpu_custom_call.1}
  #allocation0 [shape = 'u32[]', space=smem, size = 0x4, offset = 0x4, fixed_abs, tag = 'smem constant byte address 0x4 - core index']
  #allocation1 [shape = 'u32[144,128]{1,0:T(1,128)}', space=vmem, size = 0x12000, scoped, tag = 'internal scratch']
  #allocation2 [shape = 'f32[1,128]{1,0:T(1,128)}', space=vmem, size = 0x200, scoped, tag = 'scratch operand']
  #allocation3 [shape = 'f32[1,128]{1,0:T(1,128)}', space=vmem, size = 0x200, scoped, tag = 'scratch operand']
  %s0 = inlined_call_operand.hbm [shape: f32[16,128], index: 0, kind: input, shape index: {}]
  %s1 = inlined_call_operand.hbm [shape: f32[16,128], index: 1, kind: input, shape index: {}]
  %s2 = inlined_call_operand.hbm [shape: f32[8,128], index: 2, kind: output, shape index: {0}]
  %s3 = inlined_call_operand.hbm [shape: f32[8,128], index: 3, kind: output, shape index: {1}]
  %4 = xla_tuple %s2, %s3
  %s5 = sld [smem:[#allocation0]]
  $region42: #{tpu_custom_call.1} parent=0
    _
  %s7 = ssub.s32 1, %s5
  %s8 = scalar_select 0, %s7, %s5
  $region1: #{tpu_custom_call.1} parent=0
    #allocation4 [shape = 'u8[8192]{0}', space=vmem, size = 0x2000, scoped, tag = 'input window, operand 0, single buffered']
    #allocation5 [shape = 's32[1]{0}', space=sflag, size = 0x4, scoped, tag = 'scoped memory for tpu_custom_call.1']
    #allocation6 [shape = 's32[1]{0}', space=sflag, size = 0x4, scoped, tag = 'scoped memory for tpu_custom_call.1']
    #allocation7 [shape = 'u8[8192]{0}', space=vmem, size = 0x2000, scoped, tag = 'input window, operand 1, single buffered']
    #allocation8 [shape = 's32[1]{0}', space=sflag, size = 0x4, scoped, tag = 'scoped memory for tpu_custom_call.1']
    #allocation9 [shape = 'u8[4096]{0}', space=vmem, size = 0x1000, scoped, tag = 'output window, operand 0, single buffered']
    #allocation10 [shape = 'u8[4096]{0}', space=vmem, size = 0x1000, scoped, tag = 'output window, operand 1, single buffered']
    #allocation11 [shape = 's32[1]{0}', space=sflag, size = 0x4, scoped, tag = 'scoped memory for tpu_custom_call.1']
    %9 = vsyncpa [#allocation5], 0
    %10 = vsyncpa [#allocation8], 0
    %11 = vsyncpa [#allocation6], 0
    %12 = vsyncpa [#allocation11], 0
    // Predicated region
    $region2: #{tpu_custom_call.1} parent=1 // pred_check
      _
    $region3: #{tpu_custom_call.1} parent=1 // pred_check_branch
      %14 = sbr.rel (0) target = $region5
    $region4: #{tpu_custom_call.1} parent=1 // pred_region
      %s15 = sadd.s32 0, 0
      %p16 = scmp.lt.s32.totalorder %s15, 0
      %s17 = scalar_select %p16, %s15, 0
      %s18 = smul.u32 2, %s17
      %s20 = ssub.s32 256, 256
      %21 = vsyncadd [#allocation5], %s20
      %s22 = smul.addr %s18, 128
      %s23 = scalar_lea.hbm %s0, %s22
      %s24 = sshll.u32 [#allocation4], 4
      %s25 = int_to_ptr.vmem [resolvable:$true] %s24
      %30 = dma.hbm_to_vmem [thread:$0]  %s23, 256, %s25, [#allocation5], 128, 128, 8
    $region5: #{tpu_custom_call.1} parent=1 // pred_fallthru
      _
    // Predicated region
    $region6: #{tpu_custom_call.1} parent=1 // pred_check
      _
    $region7: #{tpu_custom_call.1} parent=1 // pred_check_branch
      %32 = sbr.rel (0) target = $region9
    $region8: #{tpu_custom_call.1} parent=1 // pred_region
      %s33 = sadd.s32 0, 0
      %p34 = scmp.lt.s32.totalorder %s33, 0
      %s35 = scalar_select %p34, %s33, 0
      %s36 = smul.u32 2, %s35
      %s38 = ssub.s32 256, 256
      %39 = vsyncadd [#allocation8], %s38
      %s40 = smul.addr %s36, 128
      %s41 = scalar_lea.hbm %s1, %s40
      %s42 = sshll.u32 [#allocation7], 4
      %s43 = int_to_ptr.vmem [resolvable:$true] %s42
      %48 = dma.hbm_to_vmem [thread:$0]  %s41, 256, %s43, [#allocation8], 128, 128, 8
    $region9: #{tpu_custom_call.1} parent=1 // pred_fallthru
      _
    // Predicated region
    $region10: #{tpu_custom_call.1} parent=1 // pred_check
      _
    $region11: #{tpu_custom_call.1} parent=1 // pred_check_branch
      %50 = sbr.rel (0) target = $region13
    $region12: #{tpu_custom_call.1} parent=1 // pred_region
      %51 = dma.done [#allocation5], 256
    $region13: #{tpu_custom_call.1} parent=1 // pred_fallthru
      _
    // Predicated region
    $region14: #{tpu_custom_call.1} parent=1 // pred_check
      _
    $region15: #{tpu_custom_call.1} parent=1 // pred_check_branch
      %53 = sbr.rel (0) target = $region17
    $region16: #{tpu_custom_call.1} parent=1 // pred_region
      %54 = dma.done [#allocation8], 256
    $region17: #{tpu_custom_call.1} parent=1 // pred_fallthru
      _
    %s55 = sadd.s32 0, 0
    %p56 = scmp.lt.s32.totalorder %s55, 0
    %s57 = scalar_select %p56, %s55, 0
    %s58 = smul.u32 2, %s57
    %s59 = sadd.s32 0, 0
    %p60 = scmp.lt.s32.totalorder %s59, 0
    %s61 = scalar_select %p60, %s59, 0
    %s62 = smul.u32 2, %s61
    %p63 = scmp.eq.s32.totalorder 0, 0
    // Predicated region
    $region18: #{tpu_custom_call.1} parent=1 // pred_check
      %p64 = pneg %p63
    $region19: #{tpu_custom_call.1} parent=1 // pred_check_branch
      %66 = sbr.rel (%p64) target = $region21
    $region20: #{tpu_custom_call.1} parent=1 // pred_region
      %67 = vst [vmem:[#allocation2] sm:$0x1] 0.0
      %68 = vst [vmem:[#allocation3] sm:$0x1] 0.0
    $region21: #{tpu_custom_call.1} parent=1 // pred_fallthru
      _
    %v69 = vld [vmem:[#allocation2] sm:$0x1]
    %v70 = vld [vmem:[#allocation4] sm:$0xff]
    %v71 = vld [vmem:[#allocation4 + $0x8] sm:$0xff]
    %vm72 = vcmask 130048
    %v74 = vsel %vm72, 1.0, 0
    %76 = vmatprep.subr.mxu0 0.0
    %77 = vmatpush1.msra.mxu0 %v70
    %78 = vmatprep.subr.mxu0 0.0
    %79 = vmatpush1.msra.mxu0 %v71
    %80 = vmatprep.subr.mxu0 0.0
    %81 = vmatpush1.msra.mxu0 0.0
    %82 = vmatprep.subr.mxu0 0.0
    %83 = vmatpush1.msra.mxu0 0.0
    %84 = vmatprep.subr.mxu0 0.0
    %85 = vmatpush1.msra.mxu0 0.0
    %86 = vmatprep.subr.mxu0 0.0
    %87 = vmatpush1.msra.mxu0 0.0
    %88 = vmatprep.subr.mxu0 0.0
    %89 = vmatpush1.msra.mxu0 0.0
    %90 = vmatprep.subr.mxu0 0.0
    %91 = vmatpush1.msra.mxu0 0.0
    %92 = vmatprep.subr.mxu0 0.0
    %93 = vmatpush1.msra.mxu0 0.0
    %94 = vmatprep.subr.mxu0 0.0
    %95 = vmatpush1.msra.mxu0 0.0
    %96 = vmatprep.subr.mxu0 0.0
    %97 = vmatpush1.msra.mxu0 0.0
    %98 = vmatprep.subr.mxu0 0.0
    %99 = vmatpush1.msra.mxu0 0.0
    %100 = vmatprep.subr.mxu0 0.0
    %101 = vmatpush1.msra.mxu0 0.0
    %102 = vmatprep.subr.mxu0 0.0
    %103 = vmatpush1.msra.mxu0 0.0
    %104 = vmatprep.subr.mxu0 0.0
    %105 = vmatpush1.msra.mxu0 0.0
    %106 = vmatprep.subr.mxu0 0.0
    %107 = vmatpush1.msra.mxu0 0.0
    %108 = vmatprep.subr.mxu0 0.0
    %109 = vmatpush1.msra.mxu0 0.0
    %110 = vmatprep.subr.mxu0 0.0
    %111 = vmatpush1.msra.mxu0 0.0
    %112 = vmatprep.subr.mxu0 0.0
    %113 = vmatpush1.msra.mxu0 0.0
    %114 = vmatprep.subr.mxu0 0.0
    %115 = vmatpush1.msra.mxu0 0.0
    %116 = vmatprep.subr.mxu0 0.0
    %117 = vmatpush1.msra.mxu0 0.0
    %118 = vmatprep.subr.mxu0 0.0
    %119 = vmatpush1.msra.mxu0 0.0
    %120 = vmatprep.subr.mxu0 0.0
    %121 = vmatpush1.msra.mxu0 0.0
    %122 = vmatprep.subr.mxu0 0.0
    %123 = vmatpush1.msra.mxu0 0.0
    %124 = vmatprep.subr.mxu0 0.0
    %125 = vmatpush1.msra.mxu0 0.0
    %126 = vmatprep.subr.mxu0 0.0
    %127 = vmatpush1.msra.mxu0 0.0
    %128 = vmatprep.subr.mxu0 0.0
    %129 = vmatpush1.msra.mxu0 0.0
    %130 = vmatprep.subr.mxu0 0.0
    %131 = vmatpush1.msra.mxu0 0.0
    %132 = vmatprep.subr.mxu0 0.0
    %133 = vmatpush1.msra.mxu0 0.0
    %134 = vmatprep.subr.mxu0 0.0
    %135 = vmatpush1.msra.mxu0 0.0
    %136 = vmatprep.subr.mxu0 0.0
    %137 = vmatpush1.msra.mxu0 0.0
    %138 = vmatprep.subr.mxu0 0.0
    %139 = vmatpush1.msra.mxu0 0.0
    %140 = vmatprep.mubr.f32.mxu0 0.0
    %141 = vmatmul.mubr.f32.gmra.mrb[0].mxu0 %v74
    %v142 = vpop.f32.mrb[0].mxu0
    %v143 = vadd.f32 0.0, %v142
    %v144 = vpop.f32.mrb[0].mxu0
    %145 = vdwg.mxu0
    %v146 = vadd.f32 %v69, %v143
    %147 = vst [vmem:[#allocation2] sm:$0x1] %v146
    %v148 = vld [vmem:[#allocation3] sm:$0x1]
    %v149 = vld [vmem:[#allocation7] sm:$0xff]
    %v150 = vld [vmem:[#allocation7 + $0x8] sm:$0xff]
    %151 = vmatprep.subr.mxu0 0.0
    %152 = vmatpush1.msra.mxu0 %v149
    %153 = vmatprep.subr.mxu0 0.0
    %154 = vmatpush1.msra.mxu0 %v150
    %155 = vmatprep.subr.mxu0 0.0
    %156 = vmatpush1.msra.mxu0 0.0
    %157 = vmatprep.subr.mxu0 0.0
    %158 = vmatpush1.msra.mxu0 0.0
    %159 = vmatprep.subr.mxu0 0.0
    %160 = vmatpush1.msra.mxu0 0.0
    %161 = vmatprep.subr.mxu0 0.0
    %162 = vmatpush1.msra.mxu0 0.0
    %163 = vmatprep.subr.mxu0 0.0
    %164 = vmatpush1.msra.mxu0 0.0
    %165 = vmatprep.subr.mxu0 0.0
    %166 = vmatpush1.msra.mxu0 0.0
    %167 = vmatprep.subr.mxu0 0.0
    %168 = vmatpush1.msra.mxu0 0.0
    %169 = vmatprep.subr.mxu0 0.0
    %170 = vmatpush1.msra.mxu0 0.0
    %171 = vmatprep.subr.mxu0 0.0
    %172 = vmatpush1.msra.mxu0 0.0
    %173 = vmatprep.subr.mxu0 0.0
    %174 = vmatpush1.msra.mxu0 0.0
    %175 = vmatprep.subr.mxu0 0.0
    %176 = vmatpush1.msra.mxu0 0.0
    %177 = vmatprep.subr.mxu0 0.0
    %178 = vmatpush1.msra.mxu0 0.0
    %179 = vmatprep.subr.mxu0 0.0
    %180 = vmatpush1.msra.mxu0 0.0
    %181 = vmatprep.subr.mxu0 0.0
    %182 = vmatpush1.msra.mxu0 0.0
    %183 = vmatprep.subr.mxu0 0.0
    %184 = vmatpush1.msra.mxu0 0.0
    %185 = vmatprep.subr.mxu0 0.0
    %186 = vmatpush1.msra.mxu0 0.0
    %187 = vmatprep.subr.mxu0 0.0
    %188 = vmatpush1.msra.mxu0 0.0
    %189 = vmatprep.subr.mxu0 0.0
    %190 = vmatpush1.msra.mxu0 0.0
    %191 = vmatprep.subr.mxu0 0.0
    %192 = vmatpush1.msra.mxu0 0.0
    %193 = vmatprep.subr.mxu0 0.0
    %194 = vmatpush1.msra.mxu0 0.0
    %195 = vmatprep.subr.mxu0 0.0
    %196 = vmatpush1.msra.mxu0 0.0
    %197 = vmatprep.subr.mxu0 0.0
    %198 = vmatpush1.msra.mxu0 0.0
    %199 = vmatprep.subr.mxu0 0.0
    %200 = vmatpush1.msra.mxu0 0.0
    %201 = vmatprep.subr.mxu0 0.0
    %202 = vmatpush1.msra.mxu0 0.0
    %203 = vmatprep.subr.mxu0 0.0
    %204 = vmatpush1.msra.mxu0 0.0
    %205 = vmatprep.subr.mxu0 0.0
    %206 = vmatpush1.msra.mxu0 0.0
    %207 = vmatprep.subr.mxu0 0.0
    %208 = vmatpush1.msra.mxu0 0.0
    %209 = vmatprep.subr.mxu0 0.0
    %210 = vmatpush1.msra.mxu0 0.0
    %211 = vmatprep.subr.mxu0 0.0
    %212 = vmatpush1.msra.mxu0 0.0
    %213 = vmatprep.subr.mxu0 0.0
    %214 = vmatpush1.msra.mxu0 0.0
    %215 = vmatprep.mubr.f32.mxu0 0.0
    %216 = vmatmul.mubr.f32.gmra.mrb[0].mxu0 %v74
    %v217 = vpop.f32.mrb[0].mxu0
    %v218 = vadd.f32 0.0, %v217
    %v219 = vpop.f32.mrb[0].mxu0
    %220 = vdwg.mxu0
    %v221 = vadd.f32 %v148, %v218
    %222 = vst [vmem:[#allocation3] sm:$0x1] %v221
    // Predicated region
    $region22: #{tpu_custom_call.1} parent=1 // pred_check
      %p223 = pneg %p63
    $region23: #{tpu_custom_call.1} parent=1 // pred_check_branch
      %225 = sbr.rel (%p223) target = $region25
    $region24: #{tpu_custom_call.1} parent=1 // pred_region
      %v226 = vld [vmem:[#allocation2] sm:$0x1]
      %v228 = vlaneseq
      %v229 = vshrl.u32 %v228, 7
      %v230 = vsub.s32 0, %v229
      %v231 = vrot.slane %v226, %v230
      %v233 = vadd.f32 %v231, 0.0
      %234 = vst [vmem:[#allocation9] sm:$0xff] %v233
      %v235 = vld [vmem:[#allocation3] sm:$0x1]
      %v237 = vlaneseq
      %v238 = vshrl.u32 %v237, 7
      %v239 = vsub.s32 0, %v238
      %v240 = vrot.slane %v235, %v239
      %v242 = vadd.f32 %v240, 0.0
      %243 = vst [vmem:[#allocation10] sm:$0xff] %v242
    $region25: #{tpu_custom_call.1} parent=1 // pred_fallthru
      _
    // Predicated region
    $region26: #{tpu_custom_call.1} parent=1 // pred_check
      _
    $region27: #{tpu_custom_call.1} parent=1 // pred_check_branch
      %245 = sbr.rel (0) target = $region29
    $region28: #{tpu_custom_call.1} parent=1 // pred_region
      %s247 = ssub.s32 128, 128
      %248 = vsyncadd [#allocation6], %s247
      %s250 = sshll.u32 [#allocation9], 4
      %s251 = int_to_ptr.vmem [resolvable:$true] %s250
      %253 = dma.vmem_to_hbm [thread:$0]  %s251, 128, %s2, [#allocation6]
    $region29: #{tpu_custom_call.1} parent=1 // pred_fallthru
      _
    // Predicated region
    $region30: #{tpu_custom_call.1} parent=1 // pred_check
      _
    $region31: #{tpu_custom_call.1} parent=1 // pred_check_branch
      %255 = sbr.rel (0) target = $region33
    $region32: #{tpu_custom_call.1} parent=1 // pred_region
      %s257 = ssub.s32 128, 128
      %258 = vsyncadd [#allocation11], %s257
      %s260 = sshll.u32 [#allocation10], 4
      %s261 = int_to_ptr.vmem [resolvable:$true] %s260
      %263 = dma.vmem_to_hbm [thread:$0]  %s261, 128, %s3, [#allocation11]
    $region33: #{tpu_custom_call.1} parent=1 // pred_fallthru
      _
    // Predicated region
    $region34: #{tpu_custom_call.1} parent=1 // pred_check
      _
    $region35: #{tpu_custom_call.1} parent=1 // pred_check_branch
      %265 = sbr.rel (0) target = $region37
    $region36: #{tpu_custom_call.1} parent=1 // pred_region
      %266 = dma.done [#allocation6], 128
    $region37: #{tpu_custom_call.1} parent=1 // pred_fallthru
      _
    // Predicated region
    $region38: #{tpu_custom_call.1} parent=1 // pred_check
      _
    $region39: #{tpu_custom_call.1} parent=1 // pred_check_branch
      %268 = sbr.rel (0) target = $region41
    $region40: #{tpu_custom_call.1} parent=1 // pred_region
      %269 = dma.done [#allocation11], 128
    $region41: #{tpu_custom_call.1} parent=1 // pred_fallthru
      _
    %270 = vsyncpa [#allocation5], 1
    %271 = vsyncpa [#allocation8], 1
    %272 = vsyncpa [#allocation6], 1
    %273 = vsyncpa [#allocation11], 1

</llo_original>
